<compile_context>
chip_gen: v5e
topology: v5e:2x2
jax: 0.10.0
libtpu: 0.0.40
codegen_flags: <defaults>
</compile_context>

<pallas_src>
import jax
import jax.numpy as jnp
from jax.experimental import pallas as pl
from jax.experimental.pallas import tpu as pltpu


# ----------------------------------------------------------------------------
# Fused kernel: 1x1 convs (channel matvecs) + masking + softmax / log_softmax
# over the sequence dim + FV reduction.
# ----------------------------------------------------------------------------
def _intensive_output_kernel(m1_ref, m2_ref, m3_ref, mask_ref,
                             w1_ref, w2_ref, w3_ref,
                             yi_ref, logp1_ref, logp2_ref):
    # m*_ref: (TB, H, S)   mask_ref: (TB, S) int32   w*_ref: (8, H) rows 0..2 used
    tb = m1_ref.shape[0]
    nk, h = w1_ref.shape                 # 8 padded head rows: 0=FV, 1=start, 2=end
    f32 = jnp.float32

    # 1x1 Conv1d == channel-dim matvec.  The three heads are packed into the M
    # dim of one batched MXU matmul per input tensor.  MXU time is negligible
    # at this arithmetic intensity (HBM-bound kernel).
    # NOTE: a non-batched (8,H) x (H, TB*S) dot_general would avoid the weight
    # broadcast, but Mosaic's dot lowering only handles 2D / leading-batch
    # contractions, so we keep the proven batched einsum; the broadcast is a
    # tiny fraction (<2%) of per-step time and fully hidden by the HBM stream.
    w1 = jnp.broadcast_to(w1_ref[...][None], (tb, nk, h))
    w2 = jnp.broadcast_to(w2_ref[...][None], (tb, nk, h))
    w3 = jnp.broadcast_to(w3_ref[...][None], (tb, nk, h))
    logits = (
        jnp.einsum("bkh,bhs->bks", w1, m1_ref[...], preferred_element_type=f32)
        + jnp.einsum("bkh,bhs->bks", w2, m2_ref[...], preferred_element_type=f32)
        + jnp.einsum("bkh,bhs->bks", w3, m3_ref[...], preferred_element_type=f32)
    )                                                          # (TB, 8, S)

    # masked_softmax fill: one VPU select, identical to mask*x + (1-mask)*-1e30
    # for a 0/1 mask.
    valid = (mask_ref[...] != 0)[:, None, :]                   # (TB, 1, S)
    masked = jnp.where(valid, logits, -1e30)                   # (TB, 8, S)

    mx = jnp.max(masked, axis=-1, keepdims=True)               # (TB, 8, 1)
    ex = jnp.exp(masked - mx)
    sm = jnp.sum(ex, axis=-1, keepdims=True)                   # (TB, 8, 1)
    lse = mx + jnp.log(sm)                                     # (TB, 8, 1)

    # FV head (row 0): max_t softmax == 1/sm and softmax[..., 0] == ex[...,0]/sm
    #   => y_i = (1 - ex[:, 0, 0]) / sm[:, 0]   (no (TB,S) divide, no 2nd max)
    yi_ref[...] = ((1.0 - ex[:, 0, 0:1]) / sm[:, 0, :]).astype(yi_ref.dtype)

    # Span heads (rows 1, 2): masked log-softmax over the sequence dim.
    # Slice first; never build the full (TB, 8, S) log-prob temp.
    logp1_ref[...] = (masked[:, 1, :] - lse[:, 1, :]).astype(logp1_ref.dtype)
    logp2_ref[...] = (masked[:, 2, :] - lse[:, 2, :]).astype(logp2_ref.dtype)


# ----------------------------------------------------------------------------
# Batch-tile sizing from a VMEM budget.
# ----------------------------------------------------------------------------
def _choose_batch_tile(B, H, S, in_itemsize, budget_bytes):
    """Largest batch tile whose per-step working set fits `budget_bytes`."""
    # Double-buffered HBM<->VMEM slabs per batch row: 3 inputs, int32 mask,
    # 2 log-prob outputs, y_i.
    io_per_row = 2 * (3 * H * S * in_itemsize + S * 4 + 2 * S * 4 + 4)
    # In-kernel f32 intermediates per row: 3 broadcast (8, H) weight planes and
    # ~4 live (8, S) head planes (logit partials / masked / exp).
    tmp_per_row = 3 * 8 * H * 4 + 4 * 8 * S * 4
    fixed = 2 * 3 * 8 * H * 4                       # packed weights (double-buffered)
    tb = max(1, (budget_bytes - fixed) // (io_per_row + tmp_per_row))
    if tb >= B:
        # Whole batch fits in one step.  For larger batches keep >= 2 grid
        # steps so the "parallel" batch axis can shard over v7x's 2 TensorCores.
        return max(8, ((B // 2) // 8) * 8) if B >= 16 else B
    tb = max(8, (tb // 8) * 8)    # (tb, S) output blocks need tb % 8 == 0 (or tb == B)
    return min(tb, B)


# ----------------------------------------------------------------------------
# Wrapper: weight packing + pallas_call.
# ----------------------------------------------------------------------------
def intensive_output(M1, M2, M3, mask, wx, ws, we, *,
                     vmem_budget_bytes=40 << 20,   # tile-sizing budget
                     vmem_limit_bytes=48 << 20):   # scoped VMEM limit (safe on v7x)
    """Fused IntensiveOutput forward.

    M1, M2, M3 : (B, H, S) float32 (bf16 also accepted; dot accum stays f32)
    mask       : (B, S)    bool / {0,1}
    wx         : (3H,) flattened Conv1d(3H -> 1, k=1, bias=False) weight (FV head)
    ws, we     : (2H,) flattened Conv1d(2H -> 1, k=1, bias=False) weights (start/end)
    Returns (y_i (B,), log_p1 (B, S), log_p2 (B, S)).
    """
    B, H, S = M1.shape
    f32 = jnp.float32

    # Per-input weight planes; head row k: 0=FV(Wx), 1=start(Ws), 2=end(We).
    # Rows 3..7 are zero padding for clean sublane alignment.
    w1 = jnp.zeros((8, H), f32).at[0].set(wx[:H]).at[1].set(ws[:H]).at[2].set(we[:H])
    w2 = jnp.zeros((8, H), f32).at[0].set(wx[H:2 * H]).at[1].set(ws[H:])
    w3 = jnp.zeros((8, H), f32).at[0].set(wx[2 * H:]).at[2].set(we[H:])
    mask_i = mask.astype(jnp.int32)

    tb = _choose_batch_tile(B, H, S, jnp.dtype(M1.dtype).itemsize, vmem_budget_bytes)
    grid = (pl.cdiv(B, tb),)
    # NOTE: when B % tb != 0 the tail block reads a few undefined rows; their
    # outputs are dropped by Pallas, so the returned results stay correct.

    m_spec = pl.BlockSpec((tb, H, S), lambda i: (i, 0, 0))
    seq_spec = pl.BlockSpec((tb, S), lambda i: (i, 0))
    w_spec = pl.BlockSpec((8, H), lambda i: (0, 0))   # same block every step

    y_i, log_p1, log_p2 = pl.pallas_call(
        _intensive_output_kernel,
        out_shape=(jax.ShapeDtypeStruct((B, 1), f32),
                   jax.ShapeDtypeStruct((B, S), f32),
                   jax.ShapeDtypeStruct((B, S), f32)),
        grid_spec=pltpu.PrefetchScalarGridSpec(
            num_scalar_prefetch=0,
            grid=grid,
            in_specs=[m_spec, m_spec, m_spec, seq_spec, w_spec, w_spec, w_spec],
            out_specs=(pl.BlockSpec((tb, 1), lambda i: (i, 0)),
                       seq_spec, seq_spec),
        ),
        compiler_params=pltpu.CompilerParams(
            dimension_semantics=("parallel",),
            vmem_limit_bytes=vmem_limit_bytes),
    )(M1, M2, M3, mask_i, w1, w2, w3)
    return y_i.reshape(B), log_p1, log_p2


# ----------------------------------------------------------------------------
# Pure-JAX reference (mirrors the PyTorch math) for a correctness check.
# ----------------------------------------------------------------------------
def intensive_output_reference(M1, M2, M3, mask, wx, ws, we):
    maskf = mask.astype(jnp.float32)

    def masked_softmax(logits, log):
        ml = maskf * logits + (1.0 - maskf) * (-1e30)
        return (jax.nn.log_softmax if log else jax.nn.softmax)(ml, axis=-1)

    x_logits = jnp.einsum("bcs,c->bs", jnp.concatenate([M1, M2, M3], axis=1), wx)
    s_logits = jnp.einsum("bcs,c->bs", jnp.concatenate([M1, M2], axis=1), ws)
    e_logits = jnp.einsum("bcs,c->bs", jnp.concatenate([M1, M3], axis=1), we)

    sq1 = masked_softmax(x_logits, log=False)
    y_i = jnp.max(sq1, axis=-1) - sq1[:, 0]
    log_p1 = masked_softmax(s_logits, log=True)
    log_p2 = masked_softmax(e_logits, log=True)
    return y_i, log_p1, log_p2


if __name__ == "__main__":
    B, H, S = 4, 64, 128           # batch, hidden_size, seq_len (small demo shapes)
    key = jax.random.PRNGKey(0)
    ks = jax.random.split(key, 7)
    f32 = jnp.float32

    M1 = jax.random.normal(ks[0], (B, H, S), f32)
    M2 = jax.random.normal(ks[1], (B, H, S), f32)
    M3 = jax.random.normal(ks[2], (B, H, S), f32)
    # Conv1d(kernel_size=1, bias=False) weights, flattened from torch's (1, C, 1).
    wx = jax.random.normal(ks[3], (3 * H,), f32) * 0.1
    ws = jax.random.normal(ks[4], (2 * H,), f32) * 0.1
    we = jax.random.normal(ks[5], (2 * H,), f32) * 0.1
    lengths = jax.random.randint(ks[6], (B,), S // 2, S + 1)
    mask = jnp.arange(S)[None, :] < lengths[:, None]           # (B, S) bool

    y_i, log_p1, log_p2 = intensive_output(M1, M2, M3, mask, wx, ws, we)
    y_i, log_p1, log_p2 = jax.block_until_ready((y_i, log_p1, log_p2))

    ry, rp1, rp2 = intensive_output_reference(M1, M2, M3, mask, wx, ws, we)
    assert y_i.shape == (B,) and log_p1.shape == (B, S) and log_p2.shape == (B, S)
    assert jnp.allclose(y_i, ry, atol=1e-4, rtol=1e-4), "y_i mismatch"
    assert jnp.allclose(log_p1, rp1, atol=1e-4, rtol=1e-4), "log_p1 mismatch"
    assert jnp.allclose(log_p2, rp2, atol=1e-4, rtol=1e-4), "log_p2 mismatch"

    print("KERNEL_OK")
</pallas_src>

<mosaic_0001>
module attributes {stable_mosaic.version = 11 : i64} {
  func.func @_intensive_output_kernel(%arg0: i32, %arg1: memref<4x64x128xf32, #tpu.memory_space<vmem>>, %arg2: memref<4x64x128xf32, #tpu.memory_space<vmem>>, %arg3: memref<4x64x128xf32, #tpu.memory_space<vmem>>, %arg4: memref<4x128xi32, #tpu.memory_space<vmem>>, %arg5: memref<8x64xf32, #tpu.memory_space<vmem>>, %arg6: memref<8x64xf32, #tpu.memory_space<vmem>>, %arg7: memref<8x64xf32, #tpu.memory_space<vmem>>, %arg8: memref<4x1xf32, #tpu.memory_space<vmem>>, %arg9: memref<4x128xf32, #tpu.memory_space<vmem>>, %arg10: memref<4x128xf32, #tpu.memory_space<vmem>>) attributes {dimension_semantics = [#tpu.dimension_semantics<parallel>], iteration_bounds = array<i64: 1>, scalar_prefetch = 0 : i64, scratch_operands = 0 : i64, tpu.core_type = #tpu.core_type<tc>, window_params = [{transform_indices = @transform_0, window_bounds = array<i64: 4, 64, 128>}, {transform_indices = @transform_1, window_bounds = array<i64: 4, 64, 128>}, {transform_indices = @transform_2, window_bounds = array<i64: 4, 64, 128>}, {transform_indices = @transform_3, window_bounds = array<i64: 4, 128>}, {pipeline_mode = #tpu.pipeline_mode<synchronous>, transform_indices = @transform_4, window_bounds = array<i64: 8, 64>}, {pipeline_mode = #tpu.pipeline_mode<synchronous>, transform_indices = @transform_5, window_bounds = array<i64: 8, 64>}, {pipeline_mode = #tpu.pipeline_mode<synchronous>, transform_indices = @transform_6, window_bounds = array<i64: 8, 64>}, {transform_indices = @transform_7, window_bounds = array<i64: 4, 1>}, {transform_indices = @transform_8, window_bounds = array<i64: 4, 128>}, {transform_indices = @transform_9, window_bounds = array<i64: 4, 128>}]} {
    %c0 = arith.constant 0 : index
    %c0_0 = arith.constant 0 : index
    %0 = vector.load %arg5[%c0, %c0_0] : memref<8x64xf32, #tpu.memory_space<vmem>>, vector<8x64xf32>
    %1 = vector.shape_cast %0 : vector<8x64xf32> to vector<1x8x64xf32>
    %2 = vector.shape_cast %1 : vector<1x8x64xf32> to vector<1x8x64xf32>
    %3 = vector.broadcast %2 : vector<1x8x64xf32> to vector<4x8x64xf32>
    %c0_1 = arith.constant 0 : index
    %c0_2 = arith.constant 0 : index
    %4 = vector.load %arg6[%c0_1, %c0_2] : memref<8x64xf32, #tpu.memory_space<vmem>>, vector<8x64xf32>
    %5 = vector.shape_cast %4 : vector<8x64xf32> to vector<1x8x64xf32>
    %6 = vector.shape_cast %5 : vector<1x8x64xf32> to vector<1x8x64xf32>
    %7 = vector.broadcast %6 : vector<1x8x64xf32> to vector<4x8x64xf32>
    %c0_3 = arith.constant 0 : index
    %c0_4 = arith.constant 0 : index
    %8 = vector.load %arg7[%c0_3, %c0_4] : memref<8x64xf32, #tpu.memory_space<vmem>>, vector<8x64xf32>
    %9 = vector.shape_cast %8 : vector<8x64xf32> to vector<1x8x64xf32>
    %10 = vector.shape_cast %9 : vector<1x8x64xf32> to vector<1x8x64xf32>
    %11 = vector.broadcast %10 : vector<1x8x64xf32> to vector<4x8x64xf32>
    %c0_5 = arith.constant 0 : index
    %c0_6 = arith.constant 0 : index
    %c0_7 = arith.constant 0 : index
    %12 = vector.load %arg1[%c0_5, %c0_6, %c0_7] : memref<4x64x128xf32, #tpu.memory_space<vmem>>, vector<4x64x128xf32>
    "tpu.trace_start"() <{level = 10 : i32, message = "bkh,bhs->bks"}> : () -> ()
    %cst = arith.constant dense<0.000000e+00> : vector<4x8x128xf32>
    %13 = tpu.matmul %3, %12, %cst {dimension_numbers = #tpu.dot_dimension_numbers<[2], [1], [1], [2], [0, 0, 0, 1, 1, 2], [0], [0]>} : vector<4x8x64xf32>, vector<4x64x128xf32>, vector<4x8x128xf32> -> vector<4x8x128xf32>
    "tpu.trace_stop"() : () -> ()
    %c0_8 = arith.constant 0 : index
    %c0_9 = arith.constant 0 : index
    %c0_10 = arith.constant 0 : index
    %14 = vector.load %arg2[%c0_8, %c0_9, %c0_10] : memref<4x64x128xf32, #tpu.memory_space<vmem>>, vector<4x64x128xf32>
    "tpu.trace_start"() <{level = 10 : i32, message = "bkh,bhs->bks"}> : () -> ()
    %cst_11 = arith.constant dense<0.000000e+00> : vector<4x8x128xf32>
    %15 = tpu.matmul %7, %14, %cst_11 {dimension_numbers = #tpu.dot_dimension_numbers<[2], [1], [1], [2], [0, 0, 0, 1, 1, 2], [0], [0]>} : vector<4x8x64xf32>, vector<4x64x128xf32>, vector<4x8x128xf32> -> vector<4x8x128xf32>
    "tpu.trace_stop"() : () -> ()
    %16 = arith.addf %13, %15 : vector<4x8x128xf32>
    %c0_12 = arith.constant 0 : index
    %c0_13 = arith.constant 0 : index
    %c0_14 = arith.constant 0 : index
    %17 = vector.load %arg3[%c0_12, %c0_13, %c0_14] : memref<4x64x128xf32, #tpu.memory_space<vmem>>, vector<4x64x128xf32>
    "tpu.trace_start"() <{level = 10 : i32, message = "bkh,bhs->bks"}> : () -> ()
    %cst_15 = arith.constant dense<0.000000e+00> : vector<4x8x128xf32>
    %18 = tpu.matmul %11, %17, %cst_15 {dimension_numbers = #tpu.dot_dimension_numbers<[2], [1], [1], [2], [0, 0, 0, 1, 1, 2], [0], [0]>} : vector<4x8x64xf32>, vector<4x64x128xf32>, vector<4x8x128xf32> -> vector<4x8x128xf32>
    "tpu.trace_stop"() : () -> ()
    %19 = arith.addf %16, %18 : vector<4x8x128xf32>
    %c0_16 = arith.constant 0 : index
    %c0_17 = arith.constant 0 : index
    %20 = vector.load %arg4[%c0_16, %c0_17] : memref<4x128xi32, #tpu.memory_space<vmem>>, vector<4x128xi32>
    %c0_i32 = arith.constant 0 : i32
    %21 = vector.broadcast %c0_i32 : i32 to vector<4x128xi32>
    %22 = arith.cmpi ne, %20, %21 : vector<4x128xi32>
    %23 = vector.shape_cast %22 : vector<4x128xi1> to vector<4x1x128xi1>
    %cst_18 = arith.constant -1.000000e+30 : f32
    %24 = vector.shape_cast %23 : vector<4x1x128xi1> to vector<4x1x128xi1>
    %25 = vector.broadcast %24 : vector<4x1x128xi1> to vector<4x8x128xi1>
    %26 = vector.broadcast %cst_18 : f32 to vector<4x8x128xf32>
    %27 = arith.select %25, %19, %26 : vector<4x8x128xi1>, vector<4x8x128xf32>
    %cst_19 = arith.constant dense<0xFF800000> : vector<4x8xf32>
    %28 = vector.multi_reduction <maximumf>, %27, %cst_19 [2] : vector<4x8x128xf32> to vector<4x8xf32>
    %29 = vector.shape_cast %28 : vector<4x8xf32> to vector<4x8x1xf32>
    %30 = vector.broadcast %29 : vector<4x8x1xf32> to vector<4x8x128xf32>
    %31 = arith.subf %27, %30 : vector<4x8x128xf32>
    %32 = math.exp %31 : vector<4x8x128xf32>
    %cst_20 = arith.constant dense<0.000000e+00> : vector<4x8xf32>
    %33 = vector.multi_reduction <add>, %32, %cst_20 [2] : vector<4x8x128xf32> to vector<4x8xf32>
    %34 = vector.shape_cast %33 : vector<4x8xf32> to vector<4x8x1xf32>
    %35 = math.log %34 : vector<4x8x1xf32>
    %36 = arith.addf %29, %35 : vector<4x8x1xf32>
    %37 = vector.extract_strided_slice %32 {offsets = [0, 0, 0], sizes = [4, 1, 1], strides = [1, 1, 1]} : vector<4x8x128xf32> to vector<4x1x1xf32>
    %38 = vector.shape_cast %37 : vector<4x1x1xf32> to vector<4x1xf32>
    %cst_21 = arith.constant 1.000000e+00 : f32
    %39 = vector.broadcast %cst_21 : f32 to vector<4x1xf32>
    %40 = arith.subf %39, %38 : vector<4x1xf32>
    %41 = vector.extract_strided_slice %34 {offsets = [0, 0, 0], sizes = [4, 1, 1], strides = [1, 1, 1]} : vector<4x8x1xf32> to vector<4x1x1xf32>
    %42 = vector.shape_cast %41 : vector<4x1x1xf32> to vector<4x1xf32>
    %43 = arith.divf %40, %42 : vector<4x1xf32>
    %c0_22 = arith.constant 0 : index
    %c0_23 = arith.constant 0 : index
    %44 = vector.load %arg8[%c0_22, %c0_23] : memref<4x1xf32, #tpu.memory_space<vmem>>, vector<4x1xf32>
    tpu.vector_store %arg8[%c0_22, %c0_23], %43 {strides = array<i32>} : memref<4x1xf32, #tpu.memory_space<vmem>>, vector<4x1xf32>,
    %45 = vector.extract_strided_slice %27 {offsets = [0, 1, 0], sizes = [4, 1, 128], strides = [1, 1, 1]} : vector<4x8x128xf32> to vector<4x1x128xf32>
    %46 = vector.shape_cast %45 : vector<4x1x128xf32> to vector<4x128xf32>
    %47 = vector.extract_strided_slice %36 {offsets = [0, 1, 0], sizes = [4, 1, 1], strides = [1, 1, 1]} : vector<4x8x1xf32> to vector<4x1x1xf32>
    %48 = vector.shape_cast %47 : vector<4x1x1xf32> to vector<4x1xf32>
    %49 = vector.broadcast %48 : vector<4x1xf32> to vector<4x128xf32>
    %50 = arith.subf %46, %49 : vector<4x128xf32>
    %c0_24 = arith.constant 0 : index
    %c0_25 = arith.constant 0 : index
    %51 = vector.load %arg9[%c0_24, %c0_25] : memref<4x128xf32, #tpu.memory_space<vmem>>, vector<4x128xf32>
    tpu.vector_store %arg9[%c0_24, %c0_25], %50 {strides = array<i32>} : memref<4x128xf32, #tpu.memory_space<vmem>>, vector<4x128xf32>,
    %52 = vector.extract_strided_slice %27 {offsets = [0, 2, 0], sizes = [4, 1, 128], strides = [1, 1, 1]} : vector<4x8x128xf32> to vector<4x1x128xf32>
    %53 = vector.shape_cast %52 : vector<4x1x128xf32> to vector<4x128xf32>
    %54 = vector.extract_strided_slice %36 {offsets = [0, 2, 0], sizes = [4, 1, 1], strides = [1, 1, 1]} : vector<4x8x1xf32> to vector<4x1x1xf32>
    %55 = vector.shape_cast %54 : vector<4x1x1xf32> to vector<4x1xf32>
    %56 = vector.broadcast %55 : vector<4x1xf32> to vector<4x128xf32>
    %57 = arith.subf %53, %56 : vector<4x128xf32>
    %c0_26 = arith.constant 0 : index
    %c0_27 = arith.constant 0 : index
    %58 = vector.load %arg10[%c0_26, %c0_27] : memref<4x128xf32, #tpu.memory_space<vmem>>, vector<4x128xf32>
    tpu.vector_store %arg10[%c0_26, %c0_27], %57 {strides = array<i32>} : memref<4x128xf32, #tpu.memory_space<vmem>>, vector<4x128xf32>,
    return
  }
  func.func @transform_0(%arg0: i32) -> (i32, i32, i32) {
    %c0_i32 = arith.constant 0 : i32
    %c0_i32_0 = arith.constant 0 : i32
    %c0_i32_1 = arith.constant 0 : i32
    return %arg0, %c0_i32, %c0_i32_0 : i32, i32, i32
  }
  func.func @transform_1(%arg0: i32) -> (i32, i32, i32) {
    %c0_i32 = arith.constant 0 : i32
    %c0_i32_0 = arith.constant 0 : i32
    %c0_i32_1 = arith.constant 0 : i32
    return %arg0, %c0_i32, %c0_i32_0 : i32, i32, i32
  }
  func.func @transform_2(%arg0: i32) -> (i32, i32, i32) {
    %c0_i32 = arith.constant 0 : i32
    %c0_i32_0 = arith.constant 0 : i32
    %c0_i32_1 = arith.constant 0 : i32
    return %arg0, %c0_i32, %c0_i32_0 : i32, i32, i32
  }
  func.func @transform_3(%arg0: i32) -> (i32, i32) {
    %c0_i32 = arith.constant 0 : i32
    %c0_i32_0 = arith.constant 0 : i32
    return %arg0, %c0_i32 : i32, i32
  }
  func.func @transform_4(%arg0: i32) -> (i32, i32) {
    %c0_i32 = arith.constant 0 : i32
    %c0_i32_0 = arith.constant 0 : i32
    %c0_i32_1 = arith.constant 0 : i32
    return %c0_i32, %c0_i32_0 : i32, i32
  }
  func.func @transform_5(%arg0: i32) -> (i32, i32) {
    %c0_i32 = arith.constant 0 : i32
    %c0_i32_0 = arith.constant 0 : i32
    %c0_i32_1 = arith.constant 0 : i32
    return %c0_i32, %c0_i32_0 : i32, i32
  }
  func.func @transform_6(%arg0: i32) -> (i32, i32) {
    %c0_i32 = arith.constant 0 : i32
    %c0_i32_0 = arith.constant 0 : i32
    %c0_i32_1 = arith.constant 0 : i32
    return %c0_i32, %c0_i32_0 : i32, i32
  }
  func.func @transform_7(%arg0: i32) -> (i32, i32) {
    %c0_i32 = arith.constant 0 : i32
    %c0_i32_0 = arith.constant 0 : i32
    return %arg0, %c0_i32 : i32, i32
  }
  func.func @transform_8(%arg0: i32) -> (i32, i32) {
    %c0_i32 = arith.constant 0 : i32
    %c0_i32_0 = arith.constant 0 : i32
    return %arg0, %c0_i32 : i32, i32
  }
  func.func @transform_9(%arg0: i32) -> (i32, i32) {
    %c0_i32 = arith.constant 0 : i32
    %c0_i32_0 = arith.constant 0 : i32
    return %arg0, %c0_i32 : i32, i32
  }
}

</mosaic_0001>

<llo_original>
// kernel: tpu_custom_call.1
$region0: #{tpu_custom_call.1}
  #allocation0 [shape = 'u32[]', space=smem, size = 0x4, offset = 0x4, fixed_abs, tag = 'smem constant byte address 0x4 - core index']
  #allocation1 [shape = 'u32[72,128]{1,0:T(1,128)}', space=vmem, size = 0x9000, scoped, tag = 'internal scratch']
  %s0 = inlined_call_operand.hbm [shape: f32[4,64,128], index: 0, kind: input, shape index: {}]
  %s1 = inlined_call_operand.hbm [shape: f32[4,64,128], index: 1, kind: input, shape index: {}]
  %s2 = inlined_call_operand.hbm [shape: f32[4,64,128], index: 2, kind: input, shape index: {}]
  %s3 = inlined_call_operand.hbm [shape: s32[4,128], index: 3, kind: input, shape index: {}]
  %s4 = inlined_call_operand.hbm [shape: f32[8,64], index: 4, kind: input, shape index: {}]
  %s5 = inlined_call_operand.hbm [shape: f32[8,64], index: 5, kind: input, shape index: {}]
  %s6 = inlined_call_operand.hbm [shape: f32[8,64], index: 6, kind: input, shape index: {}]
  %s7 = inlined_call_operand.vmem [shape: f32[4,1], index: 7, kind: output, shape index: {0}]
  %s8 = inlined_call_operand.hbm [shape: f32[4,128], index: 8, kind: output, shape index: {1}]
  %s9 = inlined_call_operand.hbm [shape: f32[4,128], index: 9, kind: output, shape index: {2}]
  %10 = xla_tuple %s7, %s8, %s9
  %s11 = sld [smem:[#allocation0]]
  $region82: #{tpu_custom_call.1} parent=0
    _
  %s13 = ssub.s32 1, %s11
  %s14 = scalar_select 0, %s13, %s11
  $region1: #{tpu_custom_call.1} parent=0
    #allocation2 [shape = 'u8[131072]{0}', space=vmem, size = 0x20000, scoped, tag = 'input window, operand 0, single buffered']
    #allocation3 [shape = 's32[1]{0}', space=sflag, size = 0x4, scoped, tag = 'scoped memory for tpu_custom_call.1']
    #allocation4 [shape = 's32[1]{0}', space=sflag, size = 0x4, scoped, tag = 'scoped memory for tpu_custom_call.1']
    #allocation5 [shape = 'u8[131072]{0}', space=vmem, size = 0x20000, scoped, tag = 'input window, operand 1, single buffered']
    #allocation6 [shape = 's32[1]{0}', space=sflag, size = 0x4, scoped, tag = 'scoped memory for tpu_custom_call.1']
    #allocation7 [shape = 'u8[131072]{0}', space=vmem, size = 0x20000, scoped, tag = 'input window, operand 2, single buffered']
    #allocation8 [shape = 'u8[2048]{0}', space=vmem, size = 0x800, scoped, tag = 'input window, operand 3, single buffered']
    #allocation9 [shape = 's32[1]{0}', space=sflag, size = 0x4, scoped, tag = 'scoped memory for tpu_custom_call.1']
    #allocation10 [shape = 'u8[4096]{0}', space=vmem, size = 0x1000, scoped, tag = 'input window, operand 4, single buffered']
    #allocation11 [shape = 'u8[4096]{0}', space=vmem, size = 0x1000, scoped, tag = 'input window, operand 5, single buffered']
    #allocation12 [shape = 's32[1]{0}', space=sflag, size = 0x4, scoped, tag = 'scoped memory for tpu_custom_call.1']
    #allocation13 [shape = 'u8[4096]{0}', space=vmem, size = 0x1000, scoped, tag = 'input window, operand 6, single buffered']
    #allocation14 [shape = 'u8[2048]{0}', space=vmem, size = 0x800, scoped, tag = 'output window, operand 1, single buffered']
    #allocation15 [shape = 'u8[2048]{0}', space=vmem, size = 0x800, scoped, tag = 'output window, operand 2, single buffered']
    #allocation16 [shape = 's32[1]{0}', space=sflag, size = 0x4, scoped, tag = 'scoped memory for tpu_custom_call.1']
    %15 = vsyncpa [#allocation3], 0
    %16 = vsyncpa [#allocation6], 0
    %17 = vsyncpa [#allocation9], 0
    %18 = vsyncpa [#allocation12], 0
    %19 = vsyncpa [#allocation4], 0
    %20 = vsyncpa [#allocation16], 0
    // Predicated region
    $region2: #{tpu_custom_call.1} parent=1 // pred_check
      _
    $region3: #{tpu_custom_call.1} parent=1 // pred_check_branch
      %22 = sbr.rel (0) target = $region5
    $region4: #{tpu_custom_call.1} parent=1 // pred_region
      %24 = vsyncadd [#allocation3], 0
      %s25 = sshll.u32 %s0, 4
      %s26 = int_to_ptr.hbm [resolvable:$true] %s25
      %s27 = sshll.u32 [#allocation2], 4
      %s28 = int_to_ptr.vmem [resolvable:$true] %s27
      %33 = dma.hbm_to_vmem [thread:$0]  %s26, 4096, %s28, [#allocation3], 128, 128, 8
    $region5: #{tpu_custom_call.1} parent=1 // pred_fallthru
      _
    // Predicated region
    $region6: #{tpu_custom_call.1} parent=1 // pred_check
      _
    $region7: #{tpu_custom_call.1} parent=1 // pred_check_branch
      %35 = sbr.rel (0) target = $region9
    $region8: #{tpu_custom_call.1} parent=1 // pred_region
      %37 = vsyncadd [#allocation6], 0
      %s38 = sshll.u32 %s1, 4
      %s39 = int_to_ptr.hbm [resolvable:$true] %s38
      %s40 = sshll.u32 [#allocation5], 4
      %s41 = int_to_ptr.vmem [resolvable:$true] %s40
      %46 = dma.hbm_to_vmem [thread:$0]  %s39, 4096, %s41, [#allocation6], 128, 128, 8
    $region9: #{tpu_custom_call.1} parent=1 // pred_fallthru
      _
    // Predicated region
    $region10: #{tpu_custom_call.1} parent=1 // pred_check
      _
    $region11: #{tpu_custom_call.1} parent=1 // pred_check_branch
      %48 = sbr.rel (0) target = $region13
    $region12: #{tpu_custom_call.1} parent=1 // pred_region
      %50 = vsyncadd [#allocation6], 0
      %s51 = sshll.u32 %s2, 4
      %s52 = int_to_ptr.hbm [resolvable:$true] %s51
      %s53 = sshll.u32 [#allocation7], 4
      %s54 = int_to_ptr.vmem [resolvable:$true] %s53
      %59 = dma.hbm_to_vmem [thread:$0]  %s52, 4096, %s54, [#allocation6], 128, 128, 8
    $region13: #{tpu_custom_call.1} parent=1 // pred_fallthru
      _
    // Predicated region
    $region14: #{tpu_custom_call.1} parent=1 // pred_check
      _
    $region15: #{tpu_custom_call.1} parent=1 // pred_check_branch
      %61 = sbr.rel (0) target = $region17
    $region16: #{tpu_custom_call.1} parent=1 // pred_region
      %63 = vsyncadd [#allocation9], 0
      %s65 = sshll.u32 %s3, 4
      %s66 = int_to_ptr.hbm [resolvable:$true] %s65
      %s67 = sshll.u32 [#allocation8], 4
      %s68 = int_to_ptr.vmem [resolvable:$true] %s67
      %70 = dma.hbm_to_vmem [thread:$0]  %s66, 64, %s68, [#allocation9]
    $region17: #{tpu_custom_call.1} parent=1 // pred_fallthru
      _
    // Predicated region
    $region18: #{tpu_custom_call.1} parent=1 // pred_check
      _
    $region19: #{tpu_custom_call.1} parent=1 // pred_check_branch
      %72 = sbr.rel (0) target = $region21
    $region20: #{tpu_custom_call.1} parent=1 // pred_region
      %74 = vsyncadd [#allocation9], 0
      %s76 = sshll.u32 %s4, 4
      %s77 = int_to_ptr.hbm [resolvable:$true] %s76
      %s78 = sshll.u32 [#allocation10], 4
      %s79 = int_to_ptr.vmem [resolvable:$true] %s78
      %81 = dma.hbm_to_vmem [thread:$0]  %s77, 128, %s79, [#allocation9]
    $region21: #{tpu_custom_call.1} parent=1 // pred_fallthru
      _
    // Predicated region
    $region22: #{tpu_custom_call.1} parent=1 // pred_check
      _
    $region23: #{tpu_custom_call.1} parent=1 // pred_check_branch
      %83 = sbr.rel (0) target = $region25
    $region24: #{tpu_custom_call.1} parent=1 // pred_region
      %85 = vsyncadd [#allocation12], 0
      %s87 = sshll.u32 %s5, 4
      %s88 = int_to_ptr.hbm [resolvable:$true] %s87
      %s89 = sshll.u32 [#allocation11], 4
      %s90 = int_to_ptr.vmem [resolvable:$true] %s89
      %92 = dma.hbm_to_vmem [thread:$0]  %s88, 128, %s90, [#allocation12]
    $region25: #{tpu_custom_call.1} parent=1 // pred_fallthru
      _
    // Predicated region
    $region26: #{tpu_custom_call.1} parent=1 // pred_check
      _
    $region27: #{tpu_custom_call.1} parent=1 // pred_check_branch
      %94 = sbr.rel (0) target = $region29
    $region28: #{tpu_custom_call.1} parent=1 // pred_region
      %96 = vsyncadd [#allocation12], 0
      %s98 = sshll.u32 %s6, 4
      %s99 = int_to_ptr.hbm [resolvable:$true] %s98
      %s100 = sshll.u32 [#allocation13], 4
      %s101 = int_to_ptr.vmem [resolvable:$true] %s100
      %103 = dma.hbm_to_vmem [thread:$0]  %s99, 128, %s101, [#allocation12]
    $region29: #{tpu_custom_call.1} parent=1 // pred_fallthru
      _
    // Predicated region
    $region30: #{tpu_custom_call.1} parent=1 // pred_check
      _
    $region31: #{tpu_custom_call.1} parent=1 // pred_check_branch
      %105 = sbr.rel (0) target = $region33
    $region32: #{tpu_custom_call.1} parent=1 // pred_region
      %107 = dma.done [#allocation3], 4096
    $region33: #{tpu_custom_call.1} parent=1 // pred_fallthru
      _
    // Predicated region
    $region34: #{tpu_custom_call.1} parent=1 // pred_check
      _
    $region35: #{tpu_custom_call.1} parent=1 // pred_check_branch
      %109 = sbr.rel (0) target = $region37
    $region36: #{tpu_custom_call.1} parent=1 // pred_region
      %111 = dma.done [#allocation6], 4096
    $region37: #{tpu_custom_call.1} parent=1 // pred_fallthru
      _
    // Predicated region
    $region38: #{tpu_custom_call.1} parent=1 // pred_check
      _
    $region39: #{tpu_custom_call.1} parent=1 // pred_check_branch
      %113 = sbr.rel (0) target = $region41
    $region40: #{tpu_custom_call.1} parent=1 // pred_region
      %115 = dma.done [#allocation6], 4096
    $region41: #{tpu_custom_call.1} parent=1 // pred_fallthru
      _
    // Predicated region
    $region42: #{tpu_custom_call.1} parent=1 // pred_check
      _
    $region43: #{tpu_custom_call.1} parent=1 // pred_check_branch
      %117 = sbr.rel (0) target = $region45
    $region44: #{tpu_custom_call.1} parent=1 // pred_region
      %119 = dma.done [#allocation9], 64
    $region45: #{tpu_custom_call.1} parent=1 // pred_fallthru
      _
    // Predicated region
    $region46: #{tpu_custom_call.1} parent=1 // pred_check
      _
    $region47: #{tpu_custom_call.1} parent=1 // pred_check_branch
      %121 = sbr.rel (0) target = $region49
    $region48: #{tpu_custom_call.1} parent=1 // pred_region
      %123 = dma.done [#allocation9], 128
    $region49: #{tpu_custom_call.1} parent=1 // pred_fallthru
      _
    // Predicated region
    $region50: #{tpu_custom_call.1} parent=1 // pred_check
      _
    $region51: #{tpu_custom_call.1} parent=1 // pred_check_branch
      %125 = sbr.rel (0) target = $region53
    $region52: #{tpu_custom_call.1} parent=1 // pred_region
      %127 = dma.done [#allocation12], 128
    $region53: #{tpu_custom_call.1} parent=1 // pred_fallthru
      _
    // Predicated region
    $region54: #{tpu_custom_call.1} parent=1 // pred_check
      _
    $region55: #{tpu_custom_call.1} parent=1 // pred_check_branch
      %129 = sbr.rel (0) target = $region57
    $region56: #{tpu_custom_call.1} parent=1 // pred_region
      %131 = dma.done [#allocation12], 128
    $region57: #{tpu_custom_call.1} parent=1 // pred_fallthru
      _
    %v132 = vld [vmem:[#allocation10] sm:$0xff]
    %v133 = vld [vmem:[#allocation11] sm:$0xff]
    %v134 = vld [vmem:[#allocation13] sm:$0xff]
    %v135 = vld [vmem:[#allocation2] sm:$0xff]
    %v136 = vld [vmem:[#allocation2 + $0x8] sm:$0xff]
    %v137 = vld [vmem:[#allocation2 + $0x10] sm:$0xff]
    %v138 = vld [vmem:[#allocation2 + $0x18] sm:$0xff]
    %v139 = vld [vmem:[#allocation2 + $0x20] sm:$0xff]
    %v140 = vld [vmem:[#allocation2 + $0x28] sm:$0xff]
    %v141 = vld [vmem:[#allocation2 + $0x30] sm:$0xff]
    %v142 = vld [vmem:[#allocation2 + $0x38] sm:$0xff]
    %v143 = vld [vmem:[#allocation2 + $0x40] sm:$0xff]
    %v144 = vld [vmem:[#allocation2 + $0x48] sm:$0xff]
    %v145 = vld [vmem:[#allocation2 + $0x50] sm:$0xff]
    %v146 = vld [vmem:[#allocation2 + $0x58] sm:$0xff]
    %v147 = vld [vmem:[#allocation2 + $0x60] sm:$0xff]
    %v148 = vld [vmem:[#allocation2 + $0x68] sm:$0xff]
    %v149 = vld [vmem:[#allocation2 + $0x70] sm:$0xff]
    %v150 = vld [vmem:[#allocation2 + $0x78] sm:$0xff]
    %v151 = vld [vmem:[#allocation2 + $0x80] sm:$0xff]
    %v152 = vld [vmem:[#allocation2 + $0x88] sm:$0xff]
    %v153 = vld [vmem:[#allocation2 + $0x90] sm:$0xff]
    %v154 = vld [vmem:[#allocation2 + $0x98] sm:$0xff]
    %v155 = vld [vmem:[#allocation2 + $0xa0] sm:$0xff]
    %v156 = vld [vmem:[#allocation2 + $0xa8] sm:$0xff]
    %v157 = vld [vmem:[#allocation2 + $0xb0] sm:$0xff]
    %v158 = vld [vmem:[#allocation2 + $0xb8] sm:$0xff]
    %v159 = vld [vmem:[#allocation2 + $0xc0] sm:$0xff]
    %v160 = vld [vmem:[#allocation2 + $0xc8] sm:$0xff]
    %v161 = vld [vmem:[#allocation2 + $0xd0] sm:$0xff]
    %v162 = vld [vmem:[#allocation2 + $0xd8] sm:$0xff]
    %v163 = vld [vmem:[#allocation2 + $0xe0] sm:$0xff]
    %v164 = vld [vmem:[#allocation2 + $0xe8] sm:$0xff]
    %v165 = vld [vmem:[#allocation2 + $0xf0] sm:$0xff]
    %v166 = vld [vmem:[#allocation2 + $0xf8] sm:$0xff]
    %v167 = vld [vmem:[#allocation5] sm:$0xff]
    %v168 = vld [vmem:[#allocation5 + $0x8] sm:$0xff]
    %v169 = vld [vmem:[#allocation5 + $0x10] sm:$0xff]
    %v170 = vld [vmem:[#allocation5 + $0x18] sm:$0xff]
    %v171 = vld [vmem:[#allocation5 + $0x20] sm:$0xff]
    %v172 = vld [vmem:[#allocation5 + $0x28] sm:$0xff]
    %v173 = vld [vmem:[#allocation5 + $0x30] sm:$0xff]
    %v174 = vld [vmem:[#allocation5 + $0x38] sm:$0xff]
    %v175 = vld [vmem:[#allocation5 + $0x40] sm:$0xff]
    %v176 = vld [vmem:[#allocation5 + $0x48] sm:$0xff]
    %v177 = vld [vmem:[#allocation5 + $0x50] sm:$0xff]
    %v178 = vld [vmem:[#allocation5 + $0x58] sm:$0xff]
    %v179 = vld [vmem:[#allocation5 + $0x60] sm:$0xff]
    %v180 = vld [vmem:[#allocation5 + $0x68] sm:$0xff]
    %v181 = vld [vmem:[#allocation5 + $0x70] sm:$0xff]
    %v182 = vld [vmem:[#allocation5 + $0x78] sm:$0xff]
    %v183 = vld [vmem:[#allocation5 + $0x80] sm:$0xff]
    %v184 = vld [vmem:[#allocation5 + $0x88] sm:$0xff]
    %v185 = vld [vmem:[#allocation5 + $0x90] sm:$0xff]
    %v186 = vld [vmem:[#allocation5 + $0x98] sm:$0xff]
    %v187 = vld [vmem:[#allocation5 + $0xa0] sm:$0xff]
    %v188 = vld [vmem:[#allocation5 + $0xa8] sm:$0xff]
    %v189 = vld [vmem:[#allocation5 + $0xb0] sm:$0xff]
    %v190 = vld [vmem:[#allocation5 + $0xb8] sm:$0xff]
    %v191 = vld [vmem:[#allocation5 + $0xc0] sm:$0xff]
    %v192 = vld [vmem:[#allocation5 + $0xc8] sm:$0xff]
    %v193 = vld [vmem:[#allocation5 + $0xd0] sm:$0xff]
    %v194 = vld [vmem:[#allocation5 + $0xd8] sm:$0xff]
    %v195 = vld [vmem:[#allocation5 + $0xe0] sm:$0xff]
    %v196 = vld [vmem:[#allocation5 + $0xe8] sm:$0xff]
    %v197 = vld [vmem:[#allocation5 + $0xf0] sm:$0xff]
    %v198 = vld [vmem:[#allocation5 + $0xf8] sm:$0xff]
    %vm199 = vcmask 523264
    %v201 = vsel %vm199, %v133, 0
    %203 = vmatpush.msra.mxu0 0.0
    %204 = vmatpush.msra.mxu0 0.0
    %205 = vmatpush.msra.mxu0 0.0
    %206 = vmatpush.msra.mxu0 0.0
    %207 = vmatpush.msra.mxu0 0.0
    %208 = vmatpush.msra.mxu0 0.0
    %209 = vmatpush.msra.mxu0 0.0
    %210 = vmatpush.msra.mxu0 0.0
    %211 = vmatpush.msra.mxu0 %v174
    %212 = vmatpush.msra.mxu0 %v173
    %213 = vmatpush.msra.mxu0 %v172
    %214 = vmatpush.msra.mxu0 %v171
    %215 = vmatpush.msra.mxu0 %v170
    %216 = vmatpush.msra.mxu0 %v169
    %217 = vmatpush.msra.mxu0 %v168
    %218 = vmatpush.msra.mxu0 %v167
    %219 = vmatmul.f32.gmra.mxu0 %v201
    %v220 = vpop.f32.mrf.mxu0
    %v221 = vadd.f32 0.0, %v220
    %222 = vdwg.mxu0
    %223 = vmatpush.msra.mxu0 0.0
    %224 = vmatpush.msra.mxu0 0.0
    %225 = vmatpush.msra.mxu0 0.0
    %226 = vmatpush.msra.mxu0 0.0
    %227 = vmatpush.msra.mxu0 0.0
    %228 = vmatpush.msra.mxu0 0.0
    %229 = vmatpush.msra.mxu0 0.0
    %230 = vmatpush.msra.mxu0 0.0
    %231 = vmatpush.msra.mxu0 %v182
    %232 = vmatpush.msra.mxu0 %v181
    %233 = vmatpush.msra.mxu0 %v180
    %234 = vmatpush.msra.mxu0 %v179
    %235 = vmatpush.msra.mxu0 %v178
    %236 = vmatpush.msra.mxu0 %v177
    %237 = vmatpush.msra.mxu0 %v176
    %238 = vmatpush.msra.mxu0 %v175
    %239 = vmatmul.f32.gmra.mxu0 %v201
    %v240 = vpop.f32.mrf.mxu0
    %v241 = vadd.f32 0.0, %v240
    %242 = vdwg.mxu0
    %243 = vmatpush.msra.mxu0 0.0
    %244 = vmatpush.msra.mxu0 0.0
    %245 = vmatpush.msra.mxu0 0.0
    %246 = vmatpush.msra.mxu0 0.0
    %247 = vmatpush.msra.mxu0 0.0
    %248 = vmatpush.msra.mxu0 0.0
    %249 = vmatpush.msra.mxu0 0.0
    %250 = vmatpush.msra.mxu0 0.0
    %251 = vmatpush.msra.mxu0 %v190
    %252 = vmatpush.msra.mxu0 %v189
    %253 = vmatpush.msra.mxu0 %v188
    %254 = vmatpush.msra.mxu0 %v187
    %255 = vmatpush.msra.mxu0 %v186
    %256 = vmatpush.msra.mxu0 %v185
    %257 = vmatpush.msra.mxu0 %v184
    %258 = vmatpush.msra.mxu0 %v183
    %259 = vmatmul.f32.gmra.mxu0 %v201
    %v260 = vpop.f32.mrf.mxu0
    %v261 = vadd.f32 0.0, %v260
    %262 = vdwg.mxu0
    %263 = vmatpush.msra.mxu0 0.0
    %264 = vmatpush.msra.mxu0 0.0
    %265 = vmatpush.msra.mxu0 0.0
    %266 = vmatpush.msra.mxu0 0.0
    %267 = vmatpush.msra.mxu0 0.0
    %268 = vmatpush.msra.mxu0 0.0
    %269 = vmatpush.msra.mxu0 0.0
    %270 = vmatpush.msra.mxu0 0.0
    %271 = vmatpush.msra.mxu0 %v198
    %272 = vmatpush.msra.mxu0 %v197
    %273 = vmatpush.msra.mxu0 %v196
    %274 = vmatpush.msra.mxu0 %v195
    %275 = vmatpush.msra.mxu0 %v194
    %276 = vmatpush.msra.mxu0 %v193
    %277 = vmatpush.msra.mxu0 %v192
    %278 = vmatpush.msra.mxu0 %v191
    %279 = vmatmul.f32.gmra.mxu0 %v201
    %v280 = vpop.f32.mrf.mxu0
    %v281 = vadd.f32 0.0, %v280
    %282 = vdwg.mxu0
    %v284 = vsel %vm199, %v132, 0
    %286 = vmatpush.msra.mxu0 0.0
    %287 = vmatpush.msra.mxu0 0.0
    %288 = vmatpush.msra.mxu0 0.0
    %289 = vmatpush.msra.mxu0 0.0
    %290 = vmatpush.msra.mxu0 0.0
    %291 = vmatpush.msra.mxu0 0.0
    %292 = vmatpush.msra.mxu0 0.0
    %293 = vmatpush.msra.mxu0 0.0
    %294 = vmatpush.msra.mxu0 %v142
    %295 = vmatpush.msra.mxu0 %v141
    %296 = vmatpush.msra.mxu0 %v140
    %297 = vmatpush.msra.mxu0 %v139
    %298 = vmatpush.msra.mxu0 %v138
    %299 = vmatpush.msra.mxu0 %v137
    %300 = vmatpush.msra.mxu0 %v136
    %301 = vmatpush.msra.mxu0 %v135
    %302 = vmatmul.f32.gmra.mxu0 %v284
    %v303 = vpop.f32.mrf.mxu0
    %v304 = vadd.f32 %v221, %v303
    %305 = vdwg.mxu0
    %306 = vmatpush.msra.mxu0 0.0
    %307 = vmatpush.msra.mxu0 0.0
    %308 = vmatpush.msra.mxu0 0.0
    %309 = vmatpush.msra.mxu0 0.0
    %310 = vmatpush.msra.mxu0 0.0
    %311 = vmatpush.msra.mxu0 0.0
    %312 = vmatpush.msra.mxu0 0.0
    %313 = vmatpush.msra.mxu0 0.0
    %314 = vmatpush.msra.mxu0 %v150
    %315 = vmatpush.msra.mxu0 %v149
    %316 = vmatpush.msra.mxu0 %v148
    %317 = vmatpush.msra.mxu0 %v147
    %318 = vmatpush.msra.mxu0 %v146
    %319 = vmatpush.msra.mxu0 %v145
    %320 = vmatpush.msra.mxu0 %v144
    %321 = vmatpush.msra.mxu0 %v143
    %322 = vmatmul.f32.gmra.mxu0 %v284
    %v323 = vpop.f32.mrf.mxu0
    %v324 = vadd.f32 %v241, %v323
    %325 = vdwg.mxu0
    %326 = vmatpush.msra.mxu0 0.0
    %327 = vmatpush.msra.mxu0 0.0
    %328 = vmatpush.msra.mxu0 0.0
    %329 = vmatpush.msra.mxu0 0.0
    %330 = vmatpush.msra.mxu0 0.0
    %331 = vmatpush.msra.mxu0 0.0
    %332 = vmatpush.msra.mxu0 0.0
    %333 = vmatpush.msra.mxu0 0.0
    %334 = vmatpush.msra.mxu0 %v158
    %335 = vmatpush.msra.mxu0 %v157
    %336 = vmatpush.msra.mxu0 %v156
    %337 = vmatpush.msra.mxu0 %v155
    %338 = vmatpush.msra.mxu0 %v154
    %339 = vmatpush.msra.mxu0 %v153
    %340 = vmatpush.msra.mxu0 %v152
    %341 = vmatpush.msra.mxu0 %v151
    %342 = vmatmul.f32.gmra.mxu0 %v284
    %v343 = vpop.f32.mrf.mxu0
    %v344 = vadd.f32 %v261, %v343
    %345 = vdwg.mxu0
    %346 = vmatpush.msra.mxu0 0.0
    %347 = vmatpush.msra.mxu0 0.0
    %348 = vmatpush.msra.mxu0 0.0
    %349 = vmatpush.msra.mxu0 0.0
    %350 = vmatpush.msra.mxu0 0.0
    %351 = vmatpush.msra.mxu0 0.0
    %352 = vmatpush.msra.mxu0 0.0
    %353 = vmatpush.msra.mxu0 0.0
    %354 = vmatpush.msra.mxu0 %v166
    %355 = vmatpush.msra.mxu0 %v165
    %356 = vmatpush.msra.mxu0 %v164
    %357 = vmatpush.msra.mxu0 %v163
    %358 = vmatpush.msra.mxu0 %v162
    %359 = vmatpush.msra.mxu0 %v161
    %360 = vmatpush.msra.mxu0 %v160
    %361 = vmatpush.msra.mxu0 %v159
    %362 = vmatmul.f32.gmra.mxu0 %v284
    %v363 = vpop.f32.mrf.mxu0
    %v364 = vadd.f32 %v281, %v363
    %365 = vdwg.mxu0
    %v366 = vld [vmem:[#allocation7] sm:$0xff]
    %v367 = vld [vmem:[#allocation7 + $0x8] sm:$0xff]
    %v368 = vld [vmem:[#allocation7 + $0x10] sm:$0xff]
    %v369 = vld [vmem:[#allocation7 + $0x18] sm:$0xff]
    %v370 = vld [vmem:[#allocation7 + $0x20] sm:$0xff]
    %v371 = vld [vmem:[#allocation7 + $0x28] sm:$0xff]
    %v372 = vld [vmem:[#allocation7 + $0x30] sm:$0xff]
    %v373 = vld [vmem:[#allocation7 + $0x38] sm:$0xff]
    %v374 = vld [vmem:[#allocation7 + $0x40] sm:$0xff]
    %v375 = vld [vmem:[#allocation7 + $0x48] sm:$0xff]
    %v376 = vld [vmem:[#allocation7 + $0x50] sm:$0xff]
    %v377 = vld [vmem:[#allocation7 + $0x58] sm:$0xff]
    %v378 = vld [vmem:[#allocation7 + $0x60] sm:$0xff]
    %v379 = vld [vmem:[#allocation7 + $0x68] sm:$0xff]
    %v380 = vld [vmem:[#allocation7 + $0x70] sm:$0xff]
    %v381 = vld [vmem:[#allocation7 + $0x78] sm:$0xff]
    %v382 = vld [vmem:[#allocation7 + $0x80] sm:$0xff]
    %v383 = vld [vmem:[#allocation7 + $0x88] sm:$0xff]
    %v384 = vld [vmem:[#allocation7 + $0x90] sm:$0xff]
    %v385 = vld [vmem:[#allocation7 + $0x98] sm:$0xff]
    %v386 = vld [vmem:[#allocation7 + $0xa0] sm:$0xff]
    %v387 = vld [vmem:[#allocation7 + $0xa8] sm:$0xff]
    %v388 = vld [vmem:[#allocation7 + $0xb0] sm:$0xff]
    %v389 = vld [vmem:[#allocation7 + $0xb8] sm:$0xff]
    %v390 = vld [vmem:[#allocation7 + $0xc0] sm:$0xff]
    %v391 = vld [vmem:[#allocation7 + $0xc8] sm:$0xff]
    %v392 = vld [vmem:[#allocation7 + $0xd0] sm:$0xff]
    %v393 = vld [vmem:[#allocation7 + $0xd8] sm:$0xff]
    %v394 = vld [vmem:[#allocation7 + $0xe0] sm:$0xff]
    %v395 = vld [vmem:[#allocation7 + $0xe8] sm:$0xff]
    %v396 = vld [vmem:[#allocation7 + $0xf0] sm:$0xff]
    %v397 = vld [vmem:[#allocation7 + $0xf8] sm:$0xff]
    %v399 = vsel %vm199, %v134, 0
    %401 = vmatpush.msra.mxu0 0.0
    %402 = vmatpush.msra.mxu0 0.0
    %403 = vmatpush.msra.mxu0 0.0
    %404 = vmatpush.msra.mxu0 0.0
    %405 = vmatpush.msra.mxu0 0.0
    %406 = vmatpush.msra.mxu0 0.0
    %407 = vmatpush.msra.mxu0 0.0
    %408 = vmatpush.msra.mxu0 0.0
    %409 = vmatpush.msra.mxu0 %v373
    %410 = vmatpush.msra.mxu0 %v372
    %411 = vmatpush.msra.mxu0 %v371
    %412 = vmatpush.msra.mxu0 %v370
    %413 = vmatpush.msra.mxu0 %v369
    %414 = vmatpush.msra.mxu0 %v368
    %415 = vmatpush.msra.mxu0 %v367
    %416 = vmatpush.msra.mxu0 %v366
    %417 = vmatmul.f32.gmra.mxu0 %v399
    %v418 = vpop.f32.mrf.mxu0
    %v419 = vadd.f32 0.0, %v418
    %420 = vdwg.mxu0
    %421 = vmatpush.msra.mxu0 0.0
    %422 = vmatpush.msra.mxu0 0.0
    %423 = vmatpush.msra.mxu0 0.0
    %424 = vmatpush.msra.mxu0 0.0
    %425 = vmatpush.msra.mxu0 0.0
    %426 = vmatpush.msra.mxu0 0.0
    %427 = vmatpush.msra.mxu0 0.0
    %428 = vmatpush.msra.mxu0 0.0
    %429 = vmatpush.msra.mxu0 %v381
    %430 = vmatpush.msra.mxu0 %v380
    %431 = vmatpush.msra.mxu0 %v379
    %432 = vmatpush.msra.mxu0 %v378
    %433 = vmatpush.msra.mxu0 %v377
    %434 = vmatpush.msra.mxu0 %v376
    %435 = vmatpush.msra.mxu0 %v375
    %436 = vmatpush.msra.mxu0 %v374
    %437 = vmatmul.f32.gmra.mxu0 %v399
    %v438 = vpop.f32.mrf.mxu0
    %v439 = vadd.f32 0.0, %v438
    %440 = vdwg.mxu0
    %441 = vmatpush.msra.mxu0 0.0
    %442 = vmatpush.msra.mxu0 0.0
    %443 = vmatpush.msra.mxu0 0.0
    %444 = vmatpush.msra.mxu0 0.0
    %445 = vmatpush.msra.mxu0 0.0
    %446 = vmatpush.msra.mxu0 0.0
    %447 = vmatpush.msra.mxu0 0.0
    %448 = vmatpush.msra.mxu0 0.0
    %449 = vmatpush.msra.mxu0 %v389
    %450 = vmatpush.msra.mxu0 %v388
    %451 = vmatpush.msra.mxu0 %v387
    %452 = vmatpush.msra.mxu0 %v386
    %453 = vmatpush.msra.mxu0 %v385
    %454 = vmatpush.msra.mxu0 %v384
    %455 = vmatpush.msra.mxu0 %v383
    %456 = vmatpush.msra.mxu0 %v382
    %457 = vmatmul.f32.gmra.mxu0 %v399
    %v458 = vpop.f32.mrf.mxu0
    %v459 = vadd.f32 0.0, %v458
    %460 = vdwg.mxu0
    %461 = vmatpush.msra.mxu0 0.0
    %462 = vmatpush.msra.mxu0 0.0
    %463 = vmatpush.msra.mxu0 0.0
    %464 = vmatpush.msra.mxu0 0.0
    %465 = vmatpush.msra.mxu0 0.0
    %466 = vmatpush.msra.mxu0 0.0
    %467 = vmatpush.msra.mxu0 0.0
    %468 = vmatpush.msra.mxu0 0.0
    %469 = vmatpush.msra.mxu0 %v397
    %470 = vmatpush.msra.mxu0 %v396
    %471 = vmatpush.msra.mxu0 %v395
    %472 = vmatpush.msra.mxu0 %v394
    %473 = vmatpush.msra.mxu0 %v393
    %474 = vmatpush.msra.mxu0 %v392
    %475 = vmatpush.msra.mxu0 %v391
    %476 = vmatpush.msra.mxu0 %v390
    %477 = vmatmul.f32.gmra.mxu0 %v399
    %v478 = vpop.f32.mrf.mxu0
    %v479 = vadd.f32 0.0, %v478
    %480 = vdwg.mxu0
    %v481 = vadd.f32 %v304, %v419
    %v482 = vadd.f32 %v324, %v439
    %v483 = vadd.f32 %v344, %v459
    %v484 = vadd.f32 %v364, %v479
    %v485 = vld [vmem:[#allocation8] sm:$0xf]
    %vm486 = vcmp.ne.s32.totalorder %v485, 0
    %v487 = vsel %vm486, 1, 0
    %v488 = vrot.slane %v487, 1
    %v489 = vrot.slane %v487, 2
    %v490 = vrot.slane %v487, 3
    %vm491 = vcmp.ne.s32.totalorder %v488, 0
    %vm492 = vcmp.ne.s32.totalorder %v489, 0
    %vm493 = vcmp.ne.s32.totalorder %v490, 0
    %v494 = vsel %vm491, 1, 0
    %v495 = vsel %vm492, 1, 0
    %v496 = vsel %vm493, 1, 0
    %v497 = vperm.slane %v487, 0
    %v498 = vperm.slane %v494, 0
    %v499 = vperm.slane %v495, 0
    %v500 = vperm.slane %v496, 0
    %vm501 = vcmp.eq.s32.totalorder %v497, 1
    %vm502 = vcmp.eq.s32.totalorder %v498, 1
    %vm503 = vcmp.eq.s32.totalorder %v499, 1
    %vm504 = vcmp.eq.s32.totalorder %v500, 1
    %v505 = vsel %vm501, %v481, -1e+30
    %v506 = vsel %vm502, %v482, -1e+30
    %v507 = vsel %vm503, %v483, -1e+30
    %v508 = vsel %vm504, %v484, -1e+30
    %509 = vmax.xlane.f32.xlu0 %v505
    %v510 = vpop.xlane.xlu0 %509
    %511 = vmax.xlane.f32.xlu0 %v506
    %v512 = vpop.xlane.xlu0 %511
    %513 = vmax.xlane.f32.xlu0 %v507
    %v514 = vpop.xlane.xlu0 %513
    %515 = vmax.xlane.f32.xlu0 %v508
    %v516 = vpop.xlane.xlu0 %515
    %v517 = vsub.f32 %v505, %v510
    %v518 = vsub.f32 %v506, %v512
    %v519 = vsub.f32 %v507, %v514
    %v520 = vsub.f32 %v508, %v516
    %v521 = vmul.f32 %v517, 1.442695
    %v522 = vpow.pop %v521
    %v523 = vmul.f32 %v518, 1.442695
    %v524 = vpow.pop %v523
    %v525 = vmul.f32 %v519, 1.442695
    %v526 = vpow.pop %v525
    %v527 = vmul.f32 %v520, 1.442695
    %v528 = vpow.pop %v527
    %529 = vadd.xlane.f32.xlu0 %v522
    %v530 = vpop.xlane.xlu0 %529
    %531 = vadd.xlane.f32.xlu0 %v524
    %v532 = vpop.xlane.xlu0 %531
    %533 = vadd.xlane.f32.xlu0 %v526
    %v534 = vpop.xlane.xlu0 %533
    %535 = vadd.xlane.f32.xlu0 %v528
    %v536 = vpop.xlane.xlu0 %535
    %v537 = vlog2.pop %v530
    %v538 = vmul.f32 %v537, 0.6931472
    %v539 = vlog2.pop %v532
    %v540 = vmul.f32 %v539, 0.6931472
    %v541 = vlog2.pop %v534
    %v542 = vmul.f32 %v541, 0.6931472
    %v543 = vlog2.pop %v536
    %v544 = vmul.f32 %v543, 0.6931472
    %v545 = vadd.f32 %v510, %v538
    %v546 = vadd.f32 %v512, %v540
    %v547 = vadd.f32 %v514, %v542
    %v548 = vadd.f32 %v516, %v544
    %v549 = vsub.f32 1.0, %v522
    %v550 = vsub.f32 1.0, %v524
    %v551 = vsub.f32 1.0, %v526
    %v552 = vsub.f32 1.0, %v528
    %v553 = vrcp.pop %v530
    %v554 = vmul.f32 %v530, %v553
    %v555 = vsub.f32 1.0, %v554
    %v556 = vmul.f32 %v553, %v555
    %v557 = vadd.f32 %v553, %v556
    %vm558 = vweird.f32 %v530
    %vm559 = vweird.f32 %v553
    %vm560 = vmor %vm558, %vm559
    %v561 = vsel %vm560, %v553, %v557
    %v562 = vand.u32 2147483647, %v530
    %vm563 = vcmp.eq.f32.partialorder %v562, 8.507059e+37
    %v564 = vand.u32 %v530, 2147483648
    %v565 = vor.u32 1.1754944e-38, %v564
    %v566 = vsel %vm563, %v565, %v561
    %v567 = vmul.f32 %v549, %v566
    %v568 = vrcp.pop %v532
    %v569 = vmul.f32 %v532, %v568
    %v570 = vsub.f32 1.0, %v569
    %v571 = vmul.f32 %v568, %v570
    %v572 = vadd.f32 %v568, %v571
    %vm573 = vweird.f32 %v532
    %vm574 = vweird.f32 %v568
    %vm575 = vmor %vm573, %vm574
    %v576 = vsel %vm575, %v568, %v572
    %v577 = vand.u32 2147483647, %v532
    %vm578 = vcmp.eq.f32.partialorder %v577, 8.507059e+37
    %v579 = vand.u32 %v532, 2147483648
    %v580 = vor.u32 1.1754944e-38, %v579
    %v581 = vsel %vm578, %v580, %v576
    %v582 = vmul.f32 %v550, %v581
    %v583 = vrcp.pop %v534
    %v584 = vmul.f32 %v534, %v583
    %v585 = vsub.f32 1.0, %v584
    %v586 = vmul.f32 %v583, %v585
    %v587 = vadd.f32 %v583, %v586
    %vm588 = vweird.f32 %v534
    %vm589 = vweird.f32 %v583
    %vm590 = vmor %vm588, %vm589
    %v591 = vsel %vm590, %v583, %v587
    %v592 = vand.u32 2147483647, %v534
    %vm593 = vcmp.eq.f32.partialorder %v592, 8.507059e+37
    %v594 = vand.u32 %v534, 2147483648
    %v595 = vor.u32 1.1754944e-38, %v594
    %v596 = vsel %vm593, %v595, %v591
    %v597 = vmul.f32 %v551, %v596
    %v598 = vrcp.pop %v536
    %v599 = vmul.f32 %v536, %v598
    %v600 = vsub.f32 1.0, %v599
    %v601 = vmul.f32 %v598, %v600
    %v602 = vadd.f32 %v598, %v601
    %vm603 = vweird.f32 %v536
    %vm604 = vweird.f32 %v598
    %vm605 = vmor %vm603, %vm604
    %v606 = vsel %vm605, %v598, %v602
    %v607 = vand.u32 2147483647, %v536
    %vm608 = vcmp.eq.f32.partialorder %v607, 8.507059e+37
    %v609 = vand.u32 %v536, 2147483648
    %v610 = vor.u32 1.1754944e-38, %v609
    %v611 = vsel %vm608, %v610, %v606
    %v612 = vmul.f32 %v552, %v611
    %v617 = vrot.slane %v582, 7
    %vm618 = vcmask 1041409
    %v619 = vsel %vm618, %v617, %v567
    %v620 = vrot.slane %v597, 6
    %vm621 = vcmask 1042434
    %v622 = vsel %vm621, %v620, %v619
    %v623 = vrot.slane %v612, 5
    %vm624 = vcmask 1043459
    %v625 = vsel %vm624, %v623, %v622
    %vm627 = vcmask 3072
    %628 = vst.msk [vmem:[%s7] sm:$0xf] %vm627, %v625
    %v629 = vsub.f32 %v505, %v545
    %v630 = vsub.f32 %v506, %v546
    %v631 = vsub.f32 %v507, %v547
    %v632 = vsub.f32 %v508, %v548
    %v637 = vrot.slane %v630, 7
    %v638 = vsel %vm621, %v637, %v629
    %v639 = vrot.slane %v631, 6
    %v640 = vsel %vm624, %v639, %v638
    %v641 = vrot.slane %v632, 5
    %vm642 = vcmask 1044484
    %v643 = vsel %vm642, %v641, %v640
    %645 = vst [vmem:[#allocation14 - $0x1] sm:$0x1e] %v643
    %v646 = vsel %vm624, %v637, %v629
    %v647 = vsel %vm642, %v639, %v646
    %vm648 = vcmask 1045509
    %v649 = vsel %vm648, %v641, %v647
    %651 = vst [vmem:[#allocation15 - $0x2] sm:$0x3c] %v649
    // Predicated region
    $region58: #{tpu_custom_call.1} parent=1 // pred_check
      _
    $region59: #{tpu_custom_call.1} parent=1 // pred_check_branch
      %653 = sbr.rel (0) target = $region61
    $region60: #{tpu_custom_call.1} parent=1 // pred_region
      _
    $region61: #{tpu_custom_call.1} parent=1 // pred_fallthru
      _
    // Predicated region
    $region62: #{tpu_custom_call.1} parent=1 // pred_check
      _
    $region63: #{tpu_custom_call.1} parent=1 // pred_check_branch
      %655 = sbr.rel (0) target = $region65
    $region64: #{tpu_custom_call.1} parent=1 // pred_region
      %657 = vsyncadd [#allocation4], 0
      %s659 = sshll.u32 [#allocation14], 4
      %s660 = int_to_ptr.vmem [resolvable:$true] %s659
      %s661 = sshll.u32 %s8, 4
      %s662 = int_to_ptr.hbm [resolvable:$true] %s661
      %664 = dma.vmem_to_hbm [thread:$0]  %s660, 64, %s662, [#allocation4]
    $region65: #{tpu_custom_call.1} parent=1 // pred_fallthru
      _
    // Predicated region
    $region66: #{tpu_custom_call.1} parent=1 // pred_check
      _
    $region67: #{tpu_custom_call.1} parent=1 // pred_check_branch
      %666 = sbr.rel (0) target = $region69
    $region68: #{tpu_custom_call.1} parent=1 // pred_region
      %668 = vsyncadd [#allocation16], 0
      %s670 = sshll.u32 [#allocation15], 4
      %s671 = int_to_ptr.vmem [resolvable:$true] %s670
      %s672 = sshll.u32 %s9, 4
      %s673 = int_to_ptr.hbm [resolvable:$true] %s672
      %675 = dma.vmem_to_hbm [thread:$0]  %s671, 64, %s673, [#allocation16]
    $region69: #{tpu_custom_call.1} parent=1 // pred_fallthru
      _
    // Predicated region
    $region70: #{tpu_custom_call.1} parent=1 // pred_check
      _
    $region71: #{tpu_custom_call.1} parent=1 // pred_check_branch
      %677 = sbr.rel (0) target = $region73
    $region72: #{tpu_custom_call.1} parent=1 // pred_region
      _
    $region73: #{tpu_custom_call.1} parent=1 // pred_fallthru
      _
    // Predicated region
    $region74: #{tpu_custom_call.1} parent=1 // pred_check
      _
    $region75: #{tpu_custom_call.1} parent=1 // pred_check_branch
      %679 = sbr.rel (0) target = $region77
    $region76: #{tpu_custom_call.1} parent=1 // pred_region
      %681 = dma.done [#allocation4], 64
    $region77: #{tpu_custom_call.1} parent=1 // pred_fallthru
      _
    // Predicated region
    $region78: #{tpu_custom_call.1} parent=1 // pred_check
      _
    $region79: #{tpu_custom_call.1} parent=1 // pred_check_branch
      %683 = sbr.rel (0) target = $region81
    $region80: #{tpu_custom_call.1} parent=1 // pred_region
      %685 = dma.done [#allocation16], 64
    $region81: #{tpu_custom_call.1} parent=1 // pred_fallthru
      _
    %686 = vsyncpa [#allocation3], 1
    %687 = vsyncpa [#allocation6], 1
    %688 = vsyncpa [#allocation9], 1
    %689 = vsyncpa [#allocation12], 1
    %690 = vsyncpa [#allocation4], 1
    %691 = vsyncpa [#allocation16], 1

</llo_original>
